<compile_context>
chip_gen: v7x
topology: tpu7x:2x2x1
jax: 0.10.0
libtpu: 0.0.40
codegen_flags: <defaults>
</compile_context>

<pallas_src>
import jax
import jax.numpy as jnp
from jax import lax
from jax.experimental import pallas as pl
from jax.experimental.pallas import tpu as pltpu

# Set True on v6e / v7x to feed bf16 operands to the MXU.  Accumulation and all
# element-wise gate math stay in f32 (which is also what v5e requires).
USE_BF16_MXU = False


def _round_up(x, m):
    return ((x + m - 1) // m) * m


def _pick_chunk(T, max_chunk=32):
    """Largest divisor of T that is <= max_chunk (timesteps per grid step)."""
    for c in range(min(T, max_chunk), 0, -1):
        if T % c == 0:
            return c
    return 1


# ----------------------------------------------------------------------------
# Kernel A: hoisted input-to-hidden matmul for all timesteps of one direction.
# ----------------------------------------------------------------------------
def _input_gates_kernel(x_ref, wih_ref, bias_ref, gi_ref):
    # x_ref: (T*Bp, Din)  wih_ref: (Din, 3Hp)  bias_ref: (1, 3Hp)  gi_ref: (T*Bp, 3Hp)
    gi_ref[...] = (
        jnp.dot(x_ref[...], wih_ref[...], preferred_element_type=jnp.float32)
        + bias_ref[...]
    )


# ----------------------------------------------------------------------------
# Kernel B: GRU recurrence.  grid = (directions, T // Tc); Tc steps per call.
# ----------------------------------------------------------------------------
def _gru_recurrence_kernel(gi_ref, whh_ref, bhhn_ref, out_ref, h_ref):
    # gi_ref:   (Tc, Bp, 3Hp) precomputed input gates (r/z hidden biases folded in)
    # whh_ref:  (Hp, 3Hp)     hidden-to-hidden weights, gate-padded layout
    # bhhn_ref: (1, Hp)       hidden bias of the n-gate
    # out_ref:  (Tc, Bp, Hp)  hidden state for every timestep of the chunk
    # h_ref:    (Bp, Hp)      f32 carry across chunks (VMEM scratch)
    Hp = whh_ref.shape[0]
    Tc = gi_ref.shape[0]
    c = pl.program_id(1)

    @pl.when(c == 0)
    def _():
        h_ref[...] = jnp.zeros_like(h_ref)

    whh = whh_ref[...]          # loaded once per chunk
    bhh_n = bhhn_ref[...]       # (1, Hp)

    def step(t, h):
        gi = gi_ref[t]                                        # (Bp, 3Hp)
        gh = jnp.dot(h.astype(whh.dtype), whh,
                     preferred_element_type=jnp.float32)      # (Bp, 3Hp)
        r = jax.nn.sigmoid(gi[:, 0:Hp] + gh[:, 0:Hp])
        z = jax.nn.sigmoid(gi[:, Hp:2 * Hp] + gh[:, Hp:2 * Hp])
        n = jnp.tanh(gi[:, 2 * Hp:3 * Hp] + r * (gh[:, 2 * Hp:3 * Hp] + bhh_n))
        h_new = n + z * (h - n)                               # == (1-z)*n + z*h
        out_ref[t] = h_new                                    # lane-dense (Bp, Hp)
        return h_new

    h_ref[...] = lax.fori_loop(0, Tc, step, h_ref[...], unroll=True)


# ----------------------------------------------------------------------------
# One stacked-GRU layer (all directions fused into a single pallas_call pair).
# ----------------------------------------------------------------------------
def run_gru_layer_fused(x, dir_params, *, chunk_max=32):
    """x: (T, B, Din) in original time order.
    dir_params: list over directions of (w_ih (3H,Din), w_hh (3H,H), b_ih (3H,), b_hh (3H,)).
    Returns (layer_out (T, B, D*H), finals list of (B, H)) in original time order."""
    T, B, Din = x.shape
    D = len(dir_params)
    H = dir_params[0][1].shape[1]
    Hp = _round_up(H, 128)     # lane-aligned hidden dim
    Bp = _round_up(B, 8)       # sublane-aligned batch
    Tc = _pick_chunk(T, chunk_max)
    mxu_dtype = jnp.bfloat16 if USE_BF16_MXU else jnp.float32

    x_l, wih_l, bic_l, whh_l, bhn_l = [], [], [], [], []
    for d, (w_ih, w_hh, b_ih, b_hh) in enumerate(dir_params):
        wih_t = w_ih.T.astype(jnp.float32)   # (Din, 3H), gate order [r, z, n]
        whh_t = w_hh.T.astype(jnp.float32)   # (H, 3H)
        wih_p = jnp.zeros((Din, 3 * Hp), jnp.float32)
        whh_p = jnp.zeros((Hp, 3 * Hp), jnp.float32)
        for g in range(3):                   # place each gate on a 128-lane boundary
            wih_p = wih_p.at[:, g * Hp:g * Hp + H].set(wih_t[:, g * H:(g + 1) * H])
            whh_p = whh_p.at[:H, g * Hp:g * Hp + H].set(whh_t[:, g * H:(g + 1) * H])
        # r/z gates: fold b_hh into the precomputed input gates.  n gate keeps
        # only b_ih here; its hidden bias sits inside the r*(...) term.
        bic_p = jnp.zeros((3 * Hp,), jnp.float32)
        bic_p = bic_p.at[0:H].set(b_ih[0:H] + b_hh[0:H])
        bic_p = bic_p.at[Hp:Hp + H].set(b_ih[H:2 * H] + b_hh[H:2 * H])
        bic_p = bic_p.at[2 * Hp:2 * Hp + H].set(b_ih[2 * H:3 * H])
        bhn_p = jnp.zeros((Hp,), jnp.float32).at[:H].set(b_hh[2 * H:3 * H])

        xd = x[::-1] if d == 1 else x        # pre-flip the reverse direction
        xd = jnp.pad(xd, ((0, 0), (0, Bp - B), (0, 0)))

        x_l.append(xd.reshape(T * Bp, Din))
        wih_l.append(wih_p)
        bic_l.append(bic_p.reshape(1, 3 * Hp))
        whh_l.append(whh_p)
        bhn_l.append(bhn_p.reshape(1, Hp))

    x_both = jnp.stack(x_l).astype(mxu_dtype)       # (D, T*Bp, Din)
    wih_both = jnp.stack(wih_l).astype(mxu_dtype)   # (D, Din, 3Hp)
    bic_both = jnp.stack(bic_l)                     # (D, 1, 3Hp)  f32
    whh_both = jnp.stack(whh_l).astype(mxu_dtype)   # (D, Hp, 3Hp)
    bhn_both = jnp.stack(bhn_l)                     # (D, 1, Hp)   f32

    # --- Phase 1: hoisted input matmul for ALL timesteps & both directions ---
    gi_flat = pl.pallas_call(
        _input_gates_kernel,
        out_shape=jax.ShapeDtypeStruct((D, T * Bp, 3 * Hp), jnp.float32),
        grid_spec=pltpu.PrefetchScalarGridSpec(
            num_scalar_prefetch=0,
            grid=(D,),
            in_specs=[
                pl.BlockSpec((None, T * Bp, Din), lambda d: (d, 0, 0)),
                pl.BlockSpec((None, Din, 3 * Hp), lambda d: (d, 0, 0)),
                pl.BlockSpec((None, 1, 3 * Hp), lambda d: (d, 0, 0)),
            ],
            out_specs=pl.BlockSpec((None, T * Bp, 3 * Hp), lambda d: (d, 0, 0)),
        ),
        compiler_params=pltpu.CompilerParams(
            dimension_semantics=("parallel",)),
    )(x_both, wih_both, bic_both)
    gi_all = gi_flat.reshape(D, T, Bp, 3 * Hp)

    # --- Phase 2: serial recurrence, Tc timesteps per grid step --------------
    out_both = pl.pallas_call(
        _gru_recurrence_kernel,
        out_shape=jax.ShapeDtypeStruct((D, T, Bp, Hp), jnp.float32),
        grid_spec=pltpu.PrefetchScalarGridSpec(
            num_scalar_prefetch=0,
            grid=(D, T // Tc),
            in_specs=[
                pl.BlockSpec((None, Tc, Bp, 3 * Hp), lambda d, c: (d, c, 0, 0)),
                pl.BlockSpec((None, Hp, 3 * Hp), lambda d, c: (d, 0, 0)),
                pl.BlockSpec((None, 1, Hp), lambda d, c: (d, 0, 0)),
            ],
            out_specs=pl.BlockSpec((None, Tc, Bp, Hp), lambda d, c: (d, c, 0, 0)),
            scratch_shapes=[pltpu.VMEM((Bp, Hp), jnp.float32)],
        ),
        compiler_params=pltpu.CompilerParams(
            # direction axis parallel (v7x: 2 TensorCores), time axis sequential
            dimension_semantics=("parallel", "arbitrary"),
            vmem_limit_bytes=64 * 1024 * 1024),
    )(gi_all, whh_both, bhn_both)

    # Final hidden state of each direction = last kernel-time step (the reverse
    # direction was pre-flipped, so its last processed step is original t=0,
    # exactly torch.nn.GRU's final state for that direction).
    finals = [out_both[d, T - 1, :B, :H] for d in range(D)]

    fwd = out_both[0, :, :B, :H]
    if D == 2:
        rev = out_both[1, ::-1, :B, :H]        # flip back to original time order
        layer_out = jnp.concatenate([fwd, rev], axis=-1)
    else:
        layer_out = fwd
    return layer_out, finals


# ----------------------------------------------------------------------------
# Full GRUEncoder forward.
# ----------------------------------------------------------------------------
def gru_encoder_forward(Y, params, *, num_layers, directions):
    """Y: (batch, seq, input_size) -> z: (batch, latent_size)."""
    x = jnp.transpose(Y.astype(jnp.float32), (1, 0, 2))   # (T, B, Din)
    h_finals = []
    layer_in = x
    for layer in range(num_layers):
        dir_params = [params["gru"][(layer, d)] for d in range(directions)]
        layer_in, finals = run_gru_layer_fused(layer_in, dir_params)
        h_finals.extend(finals)                 # PyTorch (layer, direction) order

    # Mean over (L*D) final states + Linear projection: noise-level compute,
    # left to XLA per the perf review, with the mean scale folded into W.
    inv = 1.0 / len(h_finals)
    h_sum = h_finals[0]
    for hf in h_finals[1:]:
        h_sum = h_sum + hf
    return h_sum @ (params["proj_w"].T * inv) + params["proj_b"]


# ----------------------------------------------------------------------------
# Deterministic parameter init (PyTorch-style uniform(-1/sqrt(H), 1/sqrt(H))).
# ----------------------------------------------------------------------------
def init_params(key, input_size, hidden_size, latent_size, num_layers, directions):
    params = {"gru": {}}
    k = 1.0 / jnp.sqrt(hidden_size)
    for layer in range(num_layers):
        in_dim = input_size if layer == 0 else hidden_size * directions
        for d in range(directions):
            key, k1, k2, k3, k4 = jax.random.split(key, 5)
            w_ih = jax.random.uniform(k1, (3 * hidden_size, in_dim), jnp.float32, -k, k)
            w_hh = jax.random.uniform(k2, (3 * hidden_size, hidden_size), jnp.float32, -k, k)
            b_ih = jax.random.uniform(k3, (3 * hidden_size,), jnp.float32, -k, k)
            b_hh = jax.random.uniform(k4, (3 * hidden_size,), jnp.float32, -k, k)
            params["gru"][(layer, d)] = (w_ih, w_hh, b_ih, b_hh)
    kp = 1.0 / jnp.sqrt(hidden_size)
    key, k1, k2 = jax.random.split(key, 3)
    params["proj_w"] = jax.random.uniform(k1, (latent_size, hidden_size), jnp.float32, -kp, kp)
    params["proj_b"] = jax.random.uniform(k2, (latent_size,), jnp.float32, -kp, kp)
    return params


# ----------------------------------------------------------------------------
# Pure-JAX reference (mirrors torch.nn.GRU semantics) for a correctness check.
# ----------------------------------------------------------------------------
def _ref_gru_layer(x, w_ih, w_hh, b_ih, b_hh, reverse):
    H = w_hh.shape[1]

    def step(h, xt):
        gi = xt @ w_ih.T + b_ih
        gh = h @ w_hh.T + b_hh
        r = jax.nn.sigmoid(gi[:, :H] + gh[:, :H])
        z = jax.nn.sigmoid(gi[:, H:2 * H] + gh[:, H:2 * H])
        n = jnp.tanh(gi[:, 2 * H:] + r * gh[:, 2 * H:])
        h_new = (1.0 - z) * n + z * h
        return h_new, h_new

    xs = x[::-1] if reverse else x
    h0 = jnp.zeros((x.shape[1], H), jnp.float32)
    _, outs = jax.lax.scan(step, h0, xs)
    return outs[::-1] if reverse else outs


def ref_forward(Y, params, *, num_layers, directions):
    x = jnp.transpose(Y.astype(jnp.float32), (1, 0, 2))
    h_finals = []
    layer_in = x
    for layer in range(num_layers):
        dir_outs = []
        for d in range(directions):
            w_ih, w_hh, b_ih, b_hh = params["gru"][(layer, d)]
            out_seq = _ref_gru_layer(layer_in, w_ih, w_hh, b_ih, b_hh, d == 1)
            dir_outs.append(out_seq)
            h_finals.append(out_seq[0] if d == 1 else out_seq[-1])
        layer_in = (jnp.concatenate(dir_outs, axis=-1)
                    if directions == 2 else dir_outs[0])
    h_mean = jnp.mean(jnp.stack(h_finals, axis=0), axis=0)
    return h_mean @ params["proj_w"].T + params["proj_b"]


if __name__ == "__main__":
    batch, seq, input_size = 2, 8, 4
    hidden_size, latent_size = 32, 16
    num_layers, directions = 2, 2          # stacked bi-directional GRU

    key = jax.random.PRNGKey(0)
    key, pkey, ykey = jax.random.split(key, 3)
    params = init_params(pkey, input_size, hidden_size, latent_size,
                         num_layers, directions)
    Y = jax.random.normal(ykey, (batch, seq, input_size), dtype=jnp.float32)

    z = gru_encoder_forward(Y, params, num_layers=num_layers,
                            directions=directions)
    z = jax.block_until_ready(z)
    assert z.shape == (batch, latent_size)

    z_ref = jax.block_until_ready(
        ref_forward(Y, params, num_layers=num_layers, directions=directions))
    assert jnp.allclose(z, z_ref, atol=1e-4, rtol=1e-4), (
        float(jnp.max(jnp.abs(z - z_ref))))

    print("KERNEL_OK")
</pallas_src>

<mosaic_0001>
module attributes {stable_mosaic.version = 11 : i64} {
  func.func @_input_gates_kernel(%arg0: i32, %arg1: memref<1x64x4xf32, #tpu.memory_space<vmem>>, %arg2: memref<1x4x384xf32, #tpu.memory_space<vmem>>, %arg3: memref<1x1x384xf32, #tpu.memory_space<vmem>>, %arg4: memref<1x64x384xf32, #tpu.memory_space<vmem>>) attributes {dimension_semantics = [#tpu.dimension_semantics<parallel>], iteration_bounds = array<i64: 2>, scalar_prefetch = 0 : i64, scratch_operands = 0 : i64, tpu.core_type = #tpu.core_type<tc>, window_params = [{transform_indices = @transform_0, window_bounds = array<i64: 1, 64, 4>}, {transform_indices = @transform_1, window_bounds = array<i64: 1, 4, 384>}, {transform_indices = @transform_2, window_bounds = array<i64: 1, 1, 384>}, {transform_indices = @transform_3, window_bounds = array<i64: 1, 64, 384>}]} {
    %c0 = arith.constant 0 : index
    %c0_0 = arith.constant 0 : index
    %c0_1 = arith.constant 0 : index
    %0 = vector.load %arg1[%c0, %c0_0, %c0_1] : memref<1x64x4xf32, #tpu.memory_space<vmem>>, vector<1x64x4xf32>
    %1 = vector.shape_cast %0 : vector<1x64x4xf32> to vector<64x4xf32>
    %c0_2 = arith.constant 0 : index
    %c0_3 = arith.constant 0 : index
    %c0_4 = arith.constant 0 : index
    %2 = vector.load %arg2[%c0_2, %c0_3, %c0_4] : memref<1x4x384xf32, #tpu.memory_space<vmem>>, vector<1x4x384xf32>
    %3 = vector.shape_cast %2 : vector<1x4x384xf32> to vector<4x384xf32>
    %cst = arith.constant dense<0.000000e+00> : vector<64x384xf32>
    %4 = tpu.matmul %1, %3, %cst {dimension_numbers = #tpu.dot_dimension_numbers<[1], [0], [0], [1], [0, 0, 1, 1], [], []>} : vector<64x4xf32>, vector<4x384xf32>, vector<64x384xf32> -> vector<64x384xf32>
    %c0_5 = arith.constant 0 : index
    %c0_6 = arith.constant 0 : index
    %c0_7 = arith.constant 0 : index
    %5 = vector.load %arg3[%c0_5, %c0_6, %c0_7] : memref<1x1x384xf32, #tpu.memory_space<vmem>>, vector<1x1x384xf32>
    %6 = vector.shape_cast %5 : vector<1x1x384xf32> to vector<1x384xf32>
    %7 = vector.broadcast %6 : vector<1x384xf32> to vector<64x384xf32>
    %8 = arith.addf %4, %7 : vector<64x384xf32>
    %c0_8 = arith.constant 0 : index
    %c0_9 = arith.constant 0 : index
    %c0_10 = arith.constant 0 : index
    %9 = vector.load %arg4[%c0_8, %c0_9, %c0_10] : memref<1x64x384xf32, #tpu.memory_space<vmem>>, vector<1x64x384xf32>
    %10 = vector.shape_cast %9 : vector<1x64x384xf32> to vector<64x384xf32>
    %11 = vector.shape_cast %8 : vector<64x384xf32> to vector<1x64x384xf32>
    tpu.vector_store %arg4[%c0_8, %c0_9, %c0_10], %11 {strides = array<i32>} : memref<1x64x384xf32, #tpu.memory_space<vmem>>, vector<1x64x384xf32>,
    return
  }
  func.func @transform_0(%arg0: i32) -> (i32, i32, i32) {
    %c0_i32 = arith.constant 0 : i32
    %c0_i32_0 = arith.constant 0 : i32
    %c0_i32_1 = arith.constant 0 : i32
    return %arg0, %c0_i32, %c0_i32_0 : i32, i32, i32
  }
  func.func @transform_1(%arg0: i32) -> (i32, i32, i32) {
    %c0_i32 = arith.constant 0 : i32
    %c0_i32_0 = arith.constant 0 : i32
    %c0_i32_1 = arith.constant 0 : i32
    return %arg0, %c0_i32, %c0_i32_0 : i32, i32, i32
  }
  func.func @transform_2(%arg0: i32) -> (i32, i32, i32) {
    %c0_i32 = arith.constant 0 : i32
    %c0_i32_0 = arith.constant 0 : i32
    %c0_i32_1 = arith.constant 0 : i32
    return %arg0, %c0_i32, %c0_i32_0 : i32, i32, i32
  }
  func.func @transform_3(%arg0: i32) -> (i32, i32, i32) {
    %c0_i32 = arith.constant 0 : i32
    %c0_i32_0 = arith.constant 0 : i32
    %c0_i32_1 = arith.constant 0 : i32
    return %arg0, %c0_i32, %c0_i32_0 : i32, i32, i32
  }
}

</mosaic_0001>

<llo_original>
// kernel: tpu_custom_call.1
$region0: #{tpu_custom_call.1}
  #allocation0 [shape = 'u32[]', space=smem, size = 0x4, offset = 0x4, fixed_abs, tag = 'smem constant byte address 0x4 - core index']
  #allocation1 [shape = 'u32[144,128]{1,0:T(1,128)}', space=vmem, size = 0x12000, scoped, tag = 'internal scratch']
  %s0 = inlined_call_operand.vmem [shape: f32[2,64,4], index: 0, kind: input, shape index: {}]
  %s1 = inlined_call_operand.vmem [shape: f32[2,4,384], index: 1, kind: input, shape index: {}]
  %s2 = inlined_call_operand.vmem [shape: f32[2,1,384], index: 2, kind: input, shape index: {}]
  %s3 = inlined_call_operand.hbm [shape: f32[2,64,384], index: 3, kind: output, shape index: {}]
  %s4 = sld [smem:[#allocation0]]
  $region45: #{tpu_custom_call.1} parent=0
    _
  %s6 = ssub.s32 1, %s4
  %s7 = scalar_select 0, %s6, %s4
  $region1: #{tpu_custom_call.1} parent=0
    #allocation2 [shape = 'u8[196608]{0}', space=vmem, size = 0x30000, scoped, tag = 'output window, operand 0']
    #allocation3 [shape = 's32[2]{0}', space=sflag, size = 0x8, scoped, tag = 'scoped memory for tpu_custom_call.1']
    %8 = vsyncpa [#allocation3], 0
    %s9 = scalar_lea.sflag [#allocation3], 1
    %10 = vsyncpa %s9, 0
    loop: start=0, step=1, limit=4
    $region2: #{tpu_custom_call.1} parent=1 // loop_pre_header
      _
    $region3: #{tpu_custom_call.1} parent=1 // loop_header
      %s12 = sphi 0, %s16
      %p13 = scmp.ge.s32.totalorder %s12, 4
      %s22 = sphi 0, %s24
      %s25 = sphi 0, %s22
      %s26 = sphi 0, %s25
      %s42 = sphi 0, %s26
      %s48 = sphi 0, %s50
      %s51 = sphi 0, %s48
      %s52 = sphi 0, %s51
      %s68 = sphi 0, %s52
      %s74 = sphi 0, %s76
      %s77 = sphi 0, %s74
      %s78 = sphi 0, %s77
      %s94 = sphi 0, %s78
      %s100 = sphi 0, %s102
      %s103 = sphi 0, %s100
      %s104 = sphi 0, %s103
      %s120 = sphi 0, %s104
    $region4: #{tpu_custom_call.1} parent=1 // loop_header_branch
      %15 = sbr.rel (%p13) target = $region8
    $region5: #{tpu_custom_call.1} parent=1 // loop_body
      %s17 = ssub.s32 %s12, 1
      %s18 = ssub.s32 %s12, 2
      %s19 = sadd.s32 %s12, 1
      %s20 = ssub.s32 %s12, %s19
      %p21 = scmp.eq.s32.totalorder %s20, 0
      %s23 = sadd.s32 %s22, 1
      %s24 = scalar_select %p21, %s22, %s23
      %p27 = pneg %p21
      %p28 = scmp.eq.s32.totalorder %s12, 1
      %p29 = por %p27, %p28
      %p30 = scmp.ne.s32.totalorder %s22, %s25
      %p31 = scmp.eq.s32.totalorder %s12, 0
      %p32 = por %p30, %p31
      %p33 = scmp.ne.s32.totalorder %s22, %s25
      %p34 = scmp.eq.s32.totalorder %s17, 1
      %p35 = por %p33, %p34
      %p36 = scmp.ne.s32.totalorder %s25, %s26
      %p37 = scmp.eq.s32.totalorder %s17, 0
      %p38 = por %p36, %p37
      %p39 = scmp.ne.s32.totalorder %s25, %s26
      %p40 = scmp.eq.s32.totalorder %s18, 1
      %p41 = por %p39, %p40
      %p43 = scmp.ne.s32.totalorder %s26, %s42
      %p44 = scmp.eq.s32.totalorder %s18, 0
      %p45 = por %p43, %p44
      %s46 = ssub.s32 %s12, %s19
      %p47 = scmp.eq.s32.totalorder %s46, 0
      %s49 = sadd.s32 %s48, 1
      %s50 = scalar_select %p47, %s48, %s49
      %p53 = pneg %p47
      %p54 = scmp.eq.s32.totalorder %s12, 1
      %p55 = por %p53, %p54
      %p56 = scmp.ne.s32.totalorder %s48, %s51
      %p57 = scmp.eq.s32.totalorder %s12, 0
      %p58 = por %p56, %p57
      %p59 = scmp.ne.s32.totalorder %s48, %s51
      %p60 = scmp.eq.s32.totalorder %s17, 1
      %p61 = por %p59, %p60
      %p62 = scmp.ne.s32.totalorder %s51, %s52
      %p63 = scmp.eq.s32.totalorder %s17, 0
      %p64 = por %p62, %p63
      %p65 = scmp.ne.s32.totalorder %s51, %s52
      %p66 = scmp.eq.s32.totalorder %s18, 1
      %p67 = por %p65, %p66
      %p69 = scmp.ne.s32.totalorder %s52, %s68
      %p70 = scmp.eq.s32.totalorder %s18, 0
      %p71 = por %p69, %p70
      %s72 = ssub.s32 %s12, %s19
      %p73 = scmp.eq.s32.totalorder %s72, 0
      %s75 = sadd.s32 %s74, 1
      %s76 = scalar_select %p73, %s74, %s75
      %p79 = pneg %p73
      %p80 = scmp.eq.s32.totalorder %s12, 1
      %p81 = por %p79, %p80
      %p82 = scmp.ne.s32.totalorder %s74, %s77
      %p83 = scmp.eq.s32.totalorder %s12, 0
      %p84 = por %p82, %p83
      %p85 = scmp.ne.s32.totalorder %s74, %s77
      %p86 = scmp.eq.s32.totalorder %s17, 1
      %p87 = por %p85, %p86
      %p88 = scmp.ne.s32.totalorder %s77, %s78
      %p89 = scmp.eq.s32.totalorder %s17, 0
      %p90 = por %p88, %p89
      %p91 = scmp.ne.s32.totalorder %s77, %s78
      %p92 = scmp.eq.s32.totalorder %s18, 1
      %p93 = por %p91, %p92
      %p95 = scmp.ne.s32.totalorder %s78, %s94
      %p96 = scmp.eq.s32.totalorder %s18, 0
      %p97 = por %p95, %p96
      %s98 = ssub.s32 %s12, %s19
      %p99 = scmp.eq.s32.totalorder %s98, 0
      %s101 = sadd.s32 %s100, 1
      %s102 = scalar_select %p99, %s100, %s101
      %p105 = pneg %p99
      %p106 = scmp.eq.s32.totalorder %s12, 1
      %p107 = por %p105, %p106
      %p108 = scmp.ne.s32.totalorder %s100, %s103
      %p109 = scmp.eq.s32.totalorder %s12, 0
      %p110 = por %p108, %p109
      %p111 = scmp.ne.s32.totalorder %s100, %s103
      %p112 = scmp.eq.s32.totalorder %s17, 1
      %p113 = por %p111, %p112
      %p114 = scmp.ne.s32.totalorder %s103, %s104
      %p115 = scmp.eq.s32.totalorder %s17, 0
      %p116 = por %p114, %p115
      %p117 = scmp.ne.s32.totalorder %s103, %s104
      %p118 = scmp.eq.s32.totalorder %s18, 1
      %p119 = por %p117, %p118
      %p121 = scmp.ne.s32.totalorder %s104, %s120
      %p122 = scmp.eq.s32.totalorder %s18, 0
      %p123 = por %p121, %p122
      %p124 = scmp.le.s32.totalorder 1, %s12
      %p125 = scmp.lt.s32.totalorder %s12, 3
      %p126 = pnand %p124, %p125
      %p127 = pneg %p126
      // Predicated region
      $region9: #{tpu_custom_call.1} parent=5 // pred_check
        _
      $region10: #{tpu_custom_call.1} parent=5 // pred_check_branch
        %129 = sbr.rel (%p126) target = $region12
      $region11: #{tpu_custom_call.1} parent=5 // pred_region
        %s130 = ssub.s32 %s12, 1
      $region12: #{tpu_custom_call.1} parent=5 // pred_fallthru
        _
      %p131 = scmp.lt.s32.totalorder %s12, 2
      // Predicated region
      $region13: #{tpu_custom_call.1} parent=5 // pred_check
        %p132 = pneg %p131
      $region14: #{tpu_custom_call.1} parent=5 // pred_check_branch
        %134 = sbr.rel (%p132) target = $region16
      $region15: #{tpu_custom_call.1} parent=5 // pred_region
        // Predicated region
        $region17: #{tpu_custom_call.1} parent=15 // pred_check
          %p135 = pneg %p32
        $region18: #{tpu_custom_call.1} parent=15 // pred_check_branch
          %137 = sbr.rel (%p135) target = $region20
        $region19: #{tpu_custom_call.1} parent=15 // pred_region
          %p138 = scmp.lt.s32.totalorder %s12, 1
          %s139 = scalar_select %p138, %s12, 1
          %s140 = smul.addr %s139, 8
          %s141 = smul.addr %s140, 8
          %s142 = scalar_lea.vmem %s0, %s141
        $region20: #{tpu_custom_call.1} parent=15 // pred_fallthru
          _
        // Predicated region
        $region21: #{tpu_custom_call.1} parent=15 // pred_check
          %p143 = pneg %p58
        $region22: #{tpu_custom_call.1} parent=15 // pred_check_branch
          %145 = sbr.rel (%p143) target = $region24
        $region23: #{tpu_custom_call.1} parent=15 // pred_region
          %p146 = scmp.lt.s32.totalorder %s12, 1
          %s147 = scalar_select %p146, %s12, 1
          %s148 = smul.addr %s147, 3
          %s149 = smul.addr %s148, 4
          %s150 = scalar_lea.vmem %s1, %s149
        $region24: #{tpu_custom_call.1} parent=15 // pred_fallthru
          _
        // Predicated region
        $region25: #{tpu_custom_call.1} parent=15 // pred_check
          %p151 = pneg %p84
        $region26: #{tpu_custom_call.1} parent=15 // pred_check_branch
          %153 = sbr.rel (%p151) target = $region28
        $region27: #{tpu_custom_call.1} parent=15 // pred_region
          %p154 = scmp.lt.s32.totalorder %s12, 1
          %s155 = scalar_select %p154, %s12, 1
          %s156 = smul.addr %s155, 3
          %s157 = scalar_lea.vmem %s2, %s156
        $region28: #{tpu_custom_call.1} parent=15 // pred_fallthru
          _
      $region16: #{tpu_custom_call.1} parent=5 // pred_fallthru
        _
      %p158 = scmp.le.s32.totalorder 1, %s12
      %p159 = scmp.lt.s32.totalorder %s12, 3
      %p160 = pnand %p158, %p159
      %p161 = pneg %p160
      // Predicated region
      $region29: #{tpu_custom_call.1} parent=5 // pred_check
        _
      $region30: #{tpu_custom_call.1} parent=5 // pred_check_branch
        %163 = sbr.rel (%p160) target = $region32
      $region31: #{tpu_custom_call.1} parent=5 // pred_region
        %s164 = ssub.s32 %s12, 1
        %p165 = scmp.lt.s32.totalorder %s17, 1
        %s166 = scalar_select %p165, %s17, 1
        %s167 = smul.addr %s166, 8
        %s168 = smul.addr %s167, 8
        %s169 = scalar_lea.vmem %s0, %s168
        %p170 = pneg %p38
        %p171 = pneg %p35
        %p172 = scmp.lt.s32.totalorder %s17, 1
        %s173 = scalar_select %p172, %s17, 1
        %s174 = smul.addr %s173, 3
        %s175 = smul.addr %s174, 4
        %s176 = scalar_lea.vmem %s1, %s175
        %p177 = pneg %p64
        %p178 = pneg %p61
        %p179 = scmp.lt.s32.totalorder %s17, 1
        %s180 = scalar_select %p179, %s17, 1
        %s181 = smul.addr %s180, 3
        %s182 = scalar_lea.vmem %s2, %s181
        %p183 = pneg %p90
        %p184 = pneg %p87
        %p185 = pneg %p116
        %p186 = pneg %p113
        %s187 = sand.u32 %s103, 1
        %s188 = scalar_lea.sflag [#allocation3], %s187
        %s189 = sand.u32 %s103, 1
        %s190 = smul.addr %s189, 192
        %s191 = scalar_lea.vmem [#allocation2], %s190
        %p192 = scmp.lt.s32.totalorder %s17, 1
        %s193 = scalar_select %p192, %s17, 1
        %s194 = smul.addr %s193, 8
        %s195 = smul.addr %s194, 8
        %s196 = scalar_lea.vmem %s0, %s195
        %p197 = scmp.lt.s32.totalorder %s17, 1
        %s198 = scalar_select %p197, %s17, 1
        %s199 = smul.addr %s198, 3
        %s200 = smul.addr %s199, 4
        %s201 = scalar_lea.vmem %s1, %s200
        %p202 = scmp.lt.s32.totalorder %s17, 1
        %s203 = scalar_select %p202, %s17, 1
        %s204 = smul.addr %s203, 3
        %s205 = scalar_lea.vmem %s2, %s204
        %v206 = vld [vmem:[%s196] sm:$0xff]
        %v207 = vld [vmem:[%s196 + $0x8] sm:$0xff]
        %v208 = vld [vmem:[%s196 + $0x10] sm:$0xff]
        %v209 = vld [vmem:[%s196 + $0x18] sm:$0xff]
        %v210 = vld [vmem:[%s196 + $0x20] sm:$0xff]
        %v211 = vld [vmem:[%s196 + $0x28] sm:$0xff]
        %v212 = vld [vmem:[%s196 + $0x30] sm:$0xff]
        %v213 = vld [vmem:[%s196 + $0x38] sm:$0xff]
        %v214 = vld [vmem:[%s201] sm:$0xff]
        %v215 = vld [vmem:[%s201 + $0x8] sm:$0xf]
        %v216 = vld [vmem:[%s205] sm:$0x7]
        %v218 = vlaneseq
        %v219 = vshrl.u32 %v218, 7
        %v220 = vsub.s32 0, %v219
        %v221 = vrot.slane %v216, %v220
        %v222 = vlaneseq
        %v223 = vshrl.u32 %v222, 7
        %v224 = vsub.s32 1, %v223
        %v225 = vrot.slane %v216, %v224
        %v226 = vlaneseq
        %v227 = vshrl.u32 %v226, 7
        %v228 = vsub.s32 2, %v227
        %v229 = vrot.slane %v216, %v228
        %v235 = vcombine.high %v214, %v214
        %vm236 = vcmask 31744
        %v238 = vsel %vm236, %v206, 0
        %v241 = vsel %vm236, %v207, 0
        %v244 = vsel %vm236, %v208, 0
        %v247 = vsel %vm236, %v209, 0
        %v250 = vsel %vm236, %v210, 0
        %v253 = vsel %vm236, %v211, 0
        %v256 = vsel %vm236, %v212, 0
        %v259 = vsel %vm236, %v213, 0
        %vm261 = vcmask 1043456
        %v262 = vsel %vm261, %v214, 0
        %v264 = vsel %vm261, %v235, 0
        %v266 = vsel %vm261, %v215, 0
        %268 = vmatprep.subr.mxu0 %v264
        %269 = vmatpush1.msra.mxu0 %v262
        %270 = vmatprep.subr.mxu0 0.0
        %271 = vmatpush1.msra.mxu0 0.0
        %272 = vmatprep.subr.mxu0 0.0
        %273 = vmatpush1.msra.mxu0 0.0
        %274 = vmatprep.subr.mxu0 0.0
        %275 = vmatpush1.msra.mxu0 0.0
        %276 = vmatprep.subr.mxu0 0.0
        %277 = vmatpush1.msra.mxu0 0.0
        %278 = vmatprep.subr.mxu0 0.0
        %279 = vmatpush1.msra.mxu0 0.0
        %280 = vmatprep.subr.mxu0 0.0
        %281 = vmatpush1.msra.mxu0 0.0
        %282 = vmatprep.subr.mxu0 0.0
        %283 = vmatpush1.msra.mxu0 0.0
        %284 = vmatprep.subr.mxu0 0.0
        %285 = vmatpush1.msra.mxu0 0.0
        %286 = vmatprep.subr.mxu0 0.0
        %287 = vmatpush1.msra.mxu0 0.0
        %288 = vmatprep.subr.mxu0 0.0
        %289 = vmatpush1.msra.mxu0 0.0
        %290 = vmatprep.subr.mxu0 0.0
        %291 = vmatpush1.msra.mxu0 0.0
        %292 = vmatprep.subr.mxu0 0.0
        %293 = vmatpush1.msra.mxu0 0.0
        %294 = vmatprep.subr.mxu0 0.0
        %295 = vmatpush1.msra.mxu0 0.0
        %296 = vmatprep.subr.mxu0 0.0
        %297 = vmatpush1.msra.mxu0 0.0
        %298 = vmatprep.subr.mxu0 0.0
        %299 = vmatpush1.msra.mxu0 0.0
        %300 = vmatprep.subr.mxu0 0.0
        %301 = vmatpush1.msra.mxu0 0.0
        %302 = vmatprep.subr.mxu0 0.0
        %303 = vmatpush1.msra.mxu0 0.0
        %304 = vmatprep.subr.mxu0 0.0
        %305 = vmatpush1.msra.mxu0 0.0
        %306 = vmatprep.subr.mxu0 0.0
        %307 = vmatpush1.msra.mxu0 0.0
        %308 = vmatprep.subr.mxu0 0.0
        %309 = vmatpush1.msra.mxu0 0.0
        %310 = vmatprep.subr.mxu0 0.0
        %311 = vmatpush1.msra.mxu0 0.0
        %312 = vmatprep.subr.mxu0 0.0
        %313 = vmatpush1.msra.mxu0 0.0
        %314 = vmatprep.subr.mxu0 0.0
        %315 = vmatpush1.msra.mxu0 0.0
        %316 = vmatprep.subr.mxu0 0.0
        %317 = vmatpush1.msra.mxu0 0.0
        %318 = vmatprep.subr.mxu0 0.0
        %319 = vmatpush1.msra.mxu0 0.0
        %320 = vmatprep.subr.mxu0 0.0
        %321 = vmatpush1.msra.mxu0 0.0
        %322 = vmatprep.subr.mxu0 0.0
        %323 = vmatpush1.msra.mxu0 0.0
        %324 = vmatprep.subr.mxu0 0.0
        %325 = vmatpush1.msra.mxu0 0.0
        %326 = vmatprep.subr.mxu0 0.0
        %327 = vmatpush1.msra.mxu0 0.0
        %328 = vmatprep.subr.mxu0 0.0
        %329 = vmatpush1.msra.mxu0 0.0
        %330 = vmatprep.subr.mxu0 0.0
        %331 = vmatpush1.msra.mxu0 0.0
        %332 = vmatprep.mubr.f32.mxu0 0.0
        %333 = vmatmul.mubr.f32.gmra.mrb[0].mxu0 %v238
        %v334 = vpop.f32.mrb[0].mxu0
        %v335 = vadd.f32 %v221, %v334
        %v336 = vpop.f32.mrb[0].mxu0
        %v337 = vadd.f32 %v225, %v336
        %338 = vmatprep.mubr.f32.mxu0 0.0
        %339 = vmatmul.mubr.f32.gmra.mrb[0].mxu0 %v241
        %v340 = vpop.f32.mrb[0].mxu0
        %v341 = vadd.f32 %v221, %v340
        %v342 = vpop.f32.mrb[0].mxu0
        %v343 = vadd.f32 %v225, %v342
        %344 = vmatprep.mubr.f32.mxu0 0.0
        %345 = vmatmul.mubr.f32.gmra.mrb[0].mxu0 %v244
        %v346 = vpop.f32.mrb[0].mxu0
        %v347 = vadd.f32 %v221, %v346
        %v348 = vpop.f32.mrb[0].mxu0
        %v349 = vadd.f32 %v225, %v348
        %350 = vmatprep.mubr.f32.mxu0 0.0
        %351 = vmatmul.mubr.f32.gmra.mrb[0].mxu0 %v247
        %v352 = vpop.f32.mrb[0].mxu0
        %v353 = vadd.f32 %v221, %v352
        %v354 = vpop.f32.mrb[0].mxu0
        %v355 = vadd.f32 %v225, %v354
        %356 = vmatprep.mubr.f32.mxu0 0.0
        %357 = vmatmul.mubr.f32.gmra.mrb[0].mxu0 %v250
        %v358 = vpop.f32.mrb[0].mxu0
        %v359 = vadd.f32 %v221, %v358
        %v360 = vpop.f32.mrb[0].mxu0
        %v361 = vadd.f32 %v225, %v360
        %362 = vmatprep.mubr.f32.mxu0 0.0
        %363 = vmatmul.mubr.f32.gmra.mrb[0].mxu0 %v253
        %v364 = vpop.f32.mrb[0].mxu0
        %v365 = vadd.f32 %v221, %v364
        %v366 = vpop.f32.mrb[0].mxu0
        %v367 = vadd.f32 %v225, %v366
        %368 = vmatprep.mubr.f32.mxu0 0.0
        %369 = vmatmul.mubr.f32.gmra.mrb[0].mxu0 %v256
        %v370 = vpop.f32.mrb[0].mxu0
        %v371 = vadd.f32 %v221, %v370
        %v372 = vpop.f32.mrb[0].mxu0
        %v373 = vadd.f32 %v225, %v372
        %374 = vmatprep.mubr.f32.mxu0 0.0
        %375 = vmatmul.mubr.f32.gmra.mrb[0].mxu0 %v259
        %v376 = vpop.f32.mrb[0].mxu0
        %v377 = vadd.f32 %v221, %v376
        %v378 = vpop.f32.mrb[0].mxu0
        %v379 = vadd.f32 %v225, %v378
        %380 = vdwg.mxu0
        %381 = vmatprep.subr.mxu0 0.0
        %382 = vmatpush1.msra.mxu0 %v266
        %383 = vmatprep.subr.mxu0 0.0
        %384 = vmatpush1.msra.mxu0 0.0
        %385 = vmatprep.subr.mxu0 0.0
        %386 = vmatpush1.msra.mxu0 0.0
        %387 = vmatprep.subr.mxu0 0.0
        %388 = vmatpush1.msra.mxu0 0.0
        %389 = vmatprep.subr.mxu0 0.0
        %390 = vmatpush1.msra.mxu0 0.0
        %391 = vmatprep.subr.mxu0 0.0
        %392 = vmatpush1.msra.mxu0 0.0
        %393 = vmatprep.subr.mxu0 0.0
        %394 = vmatpush1.msra.mxu0 0.0
        %395 = vmatprep.subr.mxu0 0.0
        %396 = vmatpush1.msra.mxu0 0.0
        %397 = vmatprep.subr.mxu0 0.0
        %398 = vmatpush1.msra.mxu0 0.0
        %399 = vmatprep.subr.mxu0 0.0
        %400 = vmatpush1.msra.mxu0 0.0
        %401 = vmatprep.subr.mxu0 0.0
        %402 = vmatpush1.msra.mxu0 0.0
        %403 = vmatprep.subr.mxu0 0.0
        %404 = vmatpush1.msra.mxu0 0.0
        %405 = vmatprep.subr.mxu0 0.0
        %406 = vmatpush1.msra.mxu0 0.0
        %407 = vmatprep.subr.mxu0 0.0
        %408 = vmatpush1.msra.mxu0 0.0
        %409 = vmatprep.subr.mxu0 0.0
        %410 = vmatpush1.msra.mxu0 0.0
        %411 = vmatprep.subr.mxu0 0.0
        %412 = vmatpush1.msra.mxu0 0.0
        %413 = vmatprep.subr.mxu0 0.0
        %414 = vmatpush1.msra.mxu0 0.0
        %415 = vmatprep.subr.mxu0 0.0
        %416 = vmatpush1.msra.mxu0 0.0
        %417 = vmatprep.subr.mxu0 0.0
        %418 = vmatpush1.msra.mxu0 0.0
        %419 = vmatprep.subr.mxu0 0.0
        %420 = vmatpush1.msra.mxu0 0.0
        %421 = vmatprep.subr.mxu0 0.0
        %422 = vmatpush1.msra.mxu0 0.0
        %423 = vmatprep.subr.mxu0 0.0
        %424 = vmatpush1.msra.mxu0 0.0
        %425 = vmatprep.subr.mxu0 0.0
        %426 = vmatpush1.msra.mxu0 0.0
        %427 = vmatprep.subr.mxu0 0.0
        %428 = vmatpush1.msra.mxu0 0.0
        %429 = vmatprep.subr.mxu0 0.0
        %430 = vmatpush1.msra.mxu0 0.0
        %431 = vmatprep.subr.mxu0 0.0
        %432 = vmatpush1.msra.mxu0 0.0
        %433 = vmatprep.subr.mxu0 0.0
        %434 = vmatpush1.msra.mxu0 0.0
        %435 = vmatprep.subr.mxu0 0.0
        %436 = vmatpush1.msra.mxu0 0.0
        %437 = vmatprep.subr.mxu0 0.0
        %438 = vmatpush1.msra.mxu0 0.0
        %439 = vmatprep.subr.mxu0 0.0
        %440 = vmatpush1.msra.mxu0 0.0
        %441 = vmatprep.subr.mxu0 0.0
        %442 = vmatpush1.msra.mxu0 0.0
        %443 = vmatprep.subr.mxu0 0.0
        %444 = vmatpush1.msra.mxu0 0.0
        %445 = vmatprep.mubr.f32.mxu0 0.0
        %446 = vmatmul.mubr.f32.gmra.mrb[0].mxu0 %v238
        %v447 = vpop.f32.mrb[0].mxu0
        %v448 = vadd.f32 %v229, %v447
        %v449 = vpop.f32.mrb[0].mxu0
        %450 = vmatprep.mubr.f32.mxu0 0.0
        %451 = vmatmul.mubr.f32.gmra.mrb[0].mxu0 %v241
        %v452 = vpop.f32.mrb[0].mxu0
        %v453 = vadd.f32 %v229, %v452
        %v454 = vpop.f32.mrb[0].mxu0
        %455 = vmatprep.mubr.f32.mxu0 0.0
        %456 = vmatmul.mubr.f32.gmra.mrb[0].mxu0 %v244
        %v457 = vpop.f32.mrb[0].mxu0
        %v458 = vadd.f32 %v229, %v457
        %v459 = vpop.f32.mrb[0].mxu0
        %460 = vmatprep.mubr.f32.mxu0 0.0
        %461 = vmatmul.mubr.f32.gmra.mrb[0].mxu0 %v247
        %v462 = vpop.f32.mrb[0].mxu0
        %v463 = vadd.f32 %v229, %v462
        %v464 = vpop.f32.mrb[0].mxu0
        %465 = vmatprep.mubr.f32.mxu0 0.0
        %466 = vmatmul.mubr.f32.gmra.mrb[0].mxu0 %v250
        %v467 = vpop.f32.mrb[0].mxu0
        %v468 = vadd.f32 %v229, %v467
        %v469 = vpop.f32.mrb[0].mxu0
        %470 = vmatprep.mubr.f32.mxu0 0.0
        %471 = vmatmul.mubr.f32.gmra.mrb[0].mxu0 %v253
        %v472 = vpop.f32.mrb[0].mxu0
        %v473 = vadd.f32 %v229, %v472
        %v474 = vpop.f32.mrb[0].mxu0
        %475 = vmatprep.mubr.f32.mxu0 0.0
        %476 = vmatmul.mubr.f32.gmra.mrb[0].mxu0 %v256
        %v477 = vpop.f32.mrb[0].mxu0
        %v478 = vadd.f32 %v229, %v477
        %v479 = vpop.f32.mrb[0].mxu0
        %480 = vmatprep.mubr.f32.mxu0 0.0
        %481 = vmatmul.mubr.f32.gmra.mrb[0].mxu0 %v259
        %v482 = vpop.f32.mrb[0].mxu0
        %v483 = vadd.f32 %v229, %v482
        %v484 = vpop.f32.mrb[0].mxu0
        %485 = vdwg.mxu0
        %486 = vst [vmem:[%s191] sm:$0xff] %v335
        %487 = vst [vmem:[%s191 + $0x8] sm:$0xff] %v337
        %488 = vst [vmem:[%s191 + $0x10] sm:$0xff] %v448
        %489 = vst [vmem:[%s191 + $0x18] sm:$0xff] %v341
        %490 = vst [vmem:[%s191 + $0x20] sm:$0xff] %v343
        %491 = vst [vmem:[%s191 + $0x28] sm:$0xff] %v453
        %492 = vst [vmem:[%s191 + $0x30] sm:$0xff] %v347
        %493 = vst [vmem:[%s191 + $0x38] sm:$0xff] %v349
        %494 = vst [vmem:[%s191 + $0x40] sm:$0xff] %v458
        %495 = vst [vmem:[%s191 + $0x48] sm:$0xff] %v353
        %496 = vst [vmem:[%s191 + $0x50] sm:$0xff] %v355
        %497 = vst [vmem:[%s191 + $0x58] sm:$0xff] %v463
        %498 = vst [vmem:[%s191 + $0x60] sm:$0xff] %v359
        %499 = vst [vmem:[%s191 + $0x68] sm:$0xff] %v361
        %500 = vst [vmem:[%s191 + $0x70] sm:$0xff] %v468
        %501 = vst [vmem:[%s191 + $0x78] sm:$0xff] %v365
        %502 = vst [vmem:[%s191 + $0x80] sm:$0xff] %v367
        %503 = vst [vmem:[%s191 + $0x88] sm:$0xff] %v473
        %504 = vst [vmem:[%s191 + $0x90] sm:$0xff] %v371
        %505 = vst [vmem:[%s191 + $0x98] sm:$0xff] %v373
        %506 = vst [vmem:[%s191 + $0xa0] sm:$0xff] %v478
        %507 = vst [vmem:[%s191 + $0xa8] sm:$0xff] %v377
        %508 = vst [vmem:[%s191 + $0xb0] sm:$0xff] %v379
        %509 = vst [vmem:[%s191 + $0xb8] sm:$0xff] %v483
        %s510 = sand.u32 %s103, 1
        %s511 = scalar_lea.sflag [#allocation3], %s510
        %s512 = sand.u32 %s103, 1
        %s513 = smul.addr %s512, 192
        %s514 = scalar_lea.vmem [#allocation2], %s513
        // Predicated region
        $region33: #{tpu_custom_call.1} parent=31 // pred_check
          %p515 = pneg %p113
        $region34: #{tpu_custom_call.1} parent=31 // pred_check_branch
          %517 = sbr.rel (%p515) target = $region36
        $region35: #{tpu_custom_call.1} parent=31 // pred_region
          %s519 = ssub.s32 3072, 3072
          %520 = vsyncadd %s511, %s519
          %s521 = smul.addr %s17, 24
          %s522 = smul.addr %s521, 128
          %s523 = scalar_lea.hbm %s3, %s522
          %s524 = sshll.u32 %s514, 4
          %s525 = int_to_ptr.vmem [resolvable:$true] %s524
          %530 = dma.vmem_to_hbm [thread:$0]  %s525, 3072, %s523, %s511, 384, 384, 24
        $region36: #{tpu_custom_call.1} parent=31 // pred_fallthru
          _
      $region32: #{tpu_custom_call.1} parent=5 // pred_fallthru
        _
      %p531 = scmp.le.s32.totalorder 2, %s12
      // Predicated region
      $region37: #{tpu_custom_call.1} parent=5 // pred_check
        %p532 = pneg %p531
      $region38: #{tpu_custom_call.1} parent=5 // pred_check_branch
        %534 = sbr.rel (%p532) target = $region40
      $region39: #{tpu_custom_call.1} parent=5 // pred_region
        %s535 = ssub.s32 %s12, 2
        // Predicated region
        $region41: #{tpu_custom_call.1} parent=39 // pred_check
          %p536 = pneg %p119
        $region42: #{tpu_custom_call.1} parent=39 // pred_check_branch
          %538 = sbr.rel (%p536) target = $region44
        $region43: #{tpu_custom_call.1} parent=39 // pred_region
          %s539 = sand.u32 %s104, 1
          %s540 = scalar_lea.sflag [#allocation3], %s539
          %s541 = sand.u32 %s104, 1
          %s542 = smul.addr %s541, 192
          %s543 = scalar_lea.vmem [#allocation2], %s542
          %544 = dma.done %s540, 3072
        $region44: #{tpu_custom_call.1} parent=39 // pred_fallthru
          _
      $region40: #{tpu_custom_call.1} parent=5 // pred_fallthru
        _
    $region6: #{tpu_custom_call.1} parent=1 // loop_footer
      %s16 = sadd.s32 1, %s12
    $region7: #{tpu_custom_call.1} parent=1 // loop_footer_branch
      %11 = sbr.rel target = $region3
    $region8: #{tpu_custom_call.1} parent=1 // loop_exit
      _
    %545 = vsyncpa [#allocation3], 1
    %s546 = scalar_lea.sflag [#allocation3], 1
    %547 = vsyncpa %s546, 1

</llo_original>
